<compile_context>
chip_gen: v5e
topology: v5e:2x2
jax: 0.10.0
libtpu: 0.0.40
codegen_flags: <defaults>
</compile_context>

<pallas_src>
import jax
import jax.numpy as jnp
from jax.experimental import pallas as pl
from jax.experimental.pallas import tpu as pltpu

_LANE = 128
_SINGLE_K_MAX = 2048                 # K consumed in a single tile up to this
_VMEM_BUDGET = 12 * 1024 * 1024      # headroom under v5e's 16 MiB scoped VMEM


def _round_up(x, m):
    return -(-x // m) * m


def _largest_aligned_divisor(total, unit, cap):
    """Largest multiple of `unit` that divides `total` (a multiple of `unit`)
    and does not exceed `cap`; returns at least `unit`."""
    q = total // unit
    best = 1
    d = 1
    while d * d <= q:
        if q % d == 0:
            if d * unit <= cap:
                best = max(best, d)
            if (q // d) * unit <= cap:
                best = max(best, q // d)
        d += 1
    return best * unit


def _select_tiles(M, Np, Kp, itemsize, m_align, single_k,
                  budget_bytes=_VMEM_BUDGET):
    """Pick (Mp, tm, tn, tk): big, shape-dividing tiles that fit the VMEM
    budget (double-buffered inputs/outputs + optional f32 accumulator)."""
    cap_schedule = [(512, 512, 1024), (512, 256, 1024), (256, 256, 512),
                    (256, 128, 512), (128, 128, 256), (m_align, 128, 128)]
    plan = None
    for tm_cap, tn_cap, tk_cap in cap_schedule:
        if M <= tm_cap:
            # Block dim equal to the full array dim is always legal: no M pad.
            tm, Mp = M, M
        else:
            Mp = _round_up(M, m_align)
            tm = _largest_aligned_divisor(Mp, m_align, tm_cap)
        tn = _largest_aligned_divisor(Np, _LANE, tn_cap)
        tk = Kp if single_k else _largest_aligned_divisor(Kp, _LANE, tk_cap)
        acc_bytes = 0 if single_k else tm * tn * 4
        vmem = 2 * itemsize * (tm * tk + tk * tn + tn + tm * tn) + acc_bytes
        plan = (Mp, tm, tn, tk)
        if vmem <= budget_bytes:
            return plan
    return plan  # smallest-caps plan; tiny for every supported K


def _tanh_linear_fused_kernel(x_ref, wt_ref, b_ref, o_ref):
    # Single K step: matmul + bias + tanh straight into the output tile.
    y = jnp.dot(x_ref[...], wt_ref[...], preferred_element_type=jnp.float32)
    y = y + b_ref[...].astype(jnp.float32)
    o_ref[...] = jnp.tanh(y).astype(o_ref.dtype)


def _tanh_linear_acc_kernel(x_ref, wt_ref, b_ref, o_ref, acc_ref):
    # Multi-step K reduction with a resident f32 VMEM accumulator.
    k = pl.program_id(2)

    @pl.when(k == 0)
    def _():
        acc_ref[...] = jnp.zeros_like(acc_ref)

    acc_ref[...] += jnp.dot(x_ref[...], wt_ref[...],
                            preferred_element_type=jnp.float32)

    @pl.when(k == pl.num_programs(2) - 1)
    def _():
        y = acc_ref[...] + b_ref[...].astype(jnp.float32)
        o_ref[...] = jnp.tanh(y).astype(o_ref.dtype)


def _tanh_linear(x2, Wt, bp, N, K, single_k):
    """x2: (M, K); Wt: (Kp, Np) pre-transposed/padded; bp: (1, Np)."""
    M = x2.shape[0]
    Kp, Np = Wt.shape
    x_isz = jnp.dtype(x2.dtype).itemsize
    itemsize = max(x_isz, jnp.dtype(Wt.dtype).itemsize)
    m_align = {4: 8, 2: 16, 1: 32}.get(x_isz, 8)

    Mp, tm, tn, tk = _select_tiles(M, Np, Kp, itemsize, m_align, single_k)

    # Pad x only when strictly required (no pad at all on aligned shapes).
    xp = x2
    if (Mp, Kp) != (M, K):
        xp = jnp.pad(x2, ((0, Mp - M), (0, Kp - K)))

    cost = pl.CostEstimate(
        flops=2 * M * N * K,
        transcendentals=M * N,
        bytes_accessed=(M * K + K * N + N) * itemsize + M * N * x_isz)

    if single_k:
        out = pl.pallas_call(
            _tanh_linear_fused_kernel,
            out_shape=jax.ShapeDtypeStruct((Mp, Np), x2.dtype),
            grid=(Mp // tm, Np // tn),
            in_specs=[
                pl.BlockSpec((tm, Kp), lambda i, j: (i, 0)),
                pl.BlockSpec((Kp, tn), lambda i, j: (0, j)),
                pl.BlockSpec((1, tn), lambda i, j: (0, j)),
            ],
            out_specs=pl.BlockSpec((tm, tn), lambda i, j: (i, j)),
            compiler_params=pltpu.CompilerParams(
                dimension_semantics=("parallel", "parallel")),
            cost_estimate=cost,
        )(xp, Wt, bp)
    else:
        out = pl.pallas_call(
            _tanh_linear_acc_kernel,
            out_shape=jax.ShapeDtypeStruct((Mp, Np), x2.dtype),
            grid=(Mp // tm, Np // tn, Kp // tk),
            in_specs=[
                pl.BlockSpec((tm, tk), lambda i, j, k: (i, k)),
                pl.BlockSpec((tk, tn), lambda i, j, k: (k, j)),
                pl.BlockSpec((1, tn), lambda i, j, k: (0, j)),
            ],
            out_specs=pl.BlockSpec((tm, tn), lambda i, j, k: (i, j)),
            scratch_shapes=[pltpu.VMEM((tm, tn), jnp.float32)],
            compiler_params=pltpu.CompilerParams(
                dimension_semantics=("parallel", "parallel", "arbitrary")),
            cost_estimate=cost,
        )(xp, Wt, bp)

    if (Mp, Np) != (M, N):
        out = out[:M, :N]
    return out


def make_tanh_layer(W, b, *, single_k_max=_SINGLE_K_MAX):
    """Hoisted-parameter factory: prepares W^T / bias padding once and
    returns apply(x) = tanh(x @ W^T + b) for single vectors or sequences."""
    N, K = W.shape
    single_k = K <= single_k_max
    Np = _round_up(N, _LANE)
    Kp = K if single_k else _round_up(K, _LANE)

    Wt = W.T                                   # (K, N), lane-dense for MXU
    if (Kp, Np) != (K, N):
        Wt = jnp.pad(Wt, ((0, Kp - K), (0, Np - N)))
    bp = (b if Np == N else jnp.pad(b, (0, Np - N)))[None, :]   # keep 2-D

    def apply(x):
        if x.shape[-1] != K:
            raise TypeError(f'The inputs must have size {K}')
        single = (x.ndim == 1)
        x2 = x[None, :] if single else x
        out = _tanh_linear(x2, Wt, bp, N, K, single_k)
        return out[0] if single else out

    return apply


def tanh_layer(x, W, b):
    """One-shot convenience wrapper (re-prepares W/b each call; prefer
    make_tanh_layer when calling repeatedly with the same parameters)."""
    return make_tanh_layer(W, b)(x)


if __name__ == "__main__":
    key = jax.random.PRNGKey(0)
    k_w, k_b, k_x, k_w2, k_b2, k_x2, k_w3, k_b3, k_x3 = jax.random.split(key, 9)

    # ---- primary small shapes (module docstring scale): n=8, in=32, out=16 --
    in_s, out_s, n_s = 32, 16, 8
    W_s = 0.01 * jax.random.normal(k_w, (out_s, in_s), dtype=jnp.float32)
    b_s = 0.01 * jax.random.normal(k_b, (out_s,), dtype=jnp.float32)
    x_s = jax.random.normal(k_x, (n_s, in_s), dtype=jnp.float32)

    layer_s = make_tanh_layer(W_s, b_s)           # W^T/pad hoisted, reused
    y_seq = jax.block_until_ready(layer_s(x_s))
    y_vec = jax.block_until_ready(layer_s(x_s[0]))
    ref_seq = jnp.tanh(x_s @ W_s.T + b_s)
    ref_vec = jnp.tanh(W_s @ x_s[0] + b_s)
    assert y_seq.shape == (n_s, out_s) and y_vec.shape == (out_s,)
    assert jnp.allclose(y_seq, ref_seq, atol=1e-5, rtol=1e-5)
    assert jnp.allclose(y_vec, ref_vec, atol=1e-5, rtol=1e-5)

    # ---- divisor-friendly shapes: multi-tile (2,1) grid, zero padding ------
    in_m, out_m, n_m = 512, 384, 640              # tm=320, tn=384, tk=512
    W_m = 0.01 * jax.random.normal(k_w2, (out_m, in_m), dtype=jnp.float32)
    b_m = 0.01 * jax.random.normal(k_b2, (out_m,), dtype=jnp.float32)
    x_m = jax.random.normal(k_x2, (n_m, in_m), dtype=jnp.float32)

    y_m = jax.block_until_ready(tanh_layer(x_m, W_m, b_m))
    ref_m = jnp.tanh(x_m @ W_m.T + b_m)
    assert y_m.shape == (n_m, out_m)
    assert jnp.allclose(y_m, ref_m, atol=1e-2, rtol=1e-2)

    # bf16 operands: straight to the MXU, 16-row sublane alignment for M.
    y_bf = jax.block_until_ready(
        tanh_layer(x_m.astype(jnp.bfloat16), W_m.astype(jnp.bfloat16),
                   b_m.astype(jnp.bfloat16)))
    assert y_bf.dtype == jnp.bfloat16 and y_bf.shape == (n_m, out_m)
    assert jnp.allclose(y_bf.astype(jnp.float32), ref_m, atol=3e-2, rtol=3e-2)

    # ---- large-K shapes: exercises the multi-K accumulator kernel ----------
    in_l, out_l, n_l = 2304, 256, 128             # Kp=2304, tk=768 -> 3 steps
    W_l = 0.01 * jax.random.normal(k_w3, (out_l, in_l), dtype=jnp.float32)
    b_l = 0.01 * jax.random.normal(k_b3, (out_l,), dtype=jnp.float32)
    x_l = jax.random.normal(k_x3, (n_l, in_l), dtype=jnp.float32)

    y_l = jax.block_until_ready(tanh_layer(x_l, W_l, b_l))
    ref_l = jnp.tanh(x_l @ W_l.T + b_l)
    assert y_l.shape == (n_l, out_l)
    assert jnp.allclose(y_l, ref_l, atol=1e-2, rtol=1e-2)

    # error path parity with the PyTorch module
    try:
        layer_s(x_s[:, :in_s - 1])
        raise AssertionError("expected TypeError for wrong input size")
    except TypeError:
        pass

    print("KERNEL_OK")
</pallas_src>

<mosaic_0001>
module attributes {stable_mosaic.version = 11 : i64} {
  func.func @_tanh_linear_fused_kernel(%arg0: i32, %arg1: i32, %arg2: memref<8x32xf32, #tpu.memory_space<vmem>>, %arg3: memref<32x128xf32, #tpu.memory_space<vmem>>, %arg4: memref<1x128xf32, #tpu.memory_space<vmem>>, %arg5: memref<8x128xf32, #tpu.memory_space<vmem>>) attributes {dimension_semantics = [#tpu.dimension_semantics<parallel>, #tpu.dimension_semantics<parallel>], iteration_bounds = array<i64: 1, 1>, scalar_prefetch = 0 : i64, scratch_operands = 0 : i64, tpu.core_type = #tpu.core_type<tc>, window_params = [{transform_indices = @transform_0, window_bounds = array<i64: 8, 32>}, {transform_indices = @transform_1, window_bounds = array<i64: 32, 128>}, {transform_indices = @transform_2, window_bounds = array<i64: 1, 128>}, {transform_indices = @transform_3, window_bounds = array<i64: 8, 128>}]} {
    %c0 = arith.constant 0 : index
    %c0_0 = arith.constant 0 : index
    %0 = vector.load %arg2[%c0, %c0_0] : memref<8x32xf32, #tpu.memory_space<vmem>>, vector<8x32xf32>
    %c0_1 = arith.constant 0 : index
    %c0_2 = arith.constant 0 : index
    %1 = vector.load %arg3[%c0_1, %c0_2] : memref<32x128xf32, #tpu.memory_space<vmem>>, vector<32x128xf32>
    %cst = arith.constant dense<0.000000e+00> : vector<8x128xf32>
    %2 = tpu.matmul %0, %1, %cst {dimension_numbers = #tpu.dot_dimension_numbers<[1], [0], [0], [1], [0, 0, 1, 1], [], []>} : vector<8x32xf32>, vector<32x128xf32>, vector<8x128xf32> -> vector<8x128xf32>
    %c0_3 = arith.constant 0 : index
    %c0_4 = arith.constant 0 : index
    %3 = vector.load %arg4[%c0_3, %c0_4] : memref<1x128xf32, #tpu.memory_space<vmem>>, vector<1x128xf32>
    %4 = vector.broadcast %3 : vector<1x128xf32> to vector<8x128xf32>
    %5 = arith.addf %2, %4 : vector<8x128xf32>
    %6 = math.tanh %5 : vector<8x128xf32>
    %c0_5 = arith.constant 0 : index
    %c0_6 = arith.constant 0 : index
    %7 = vector.load %arg5[%c0_5, %c0_6] : memref<8x128xf32, #tpu.memory_space<vmem>>, vector<8x128xf32>
    tpu.vector_store %arg5[%c0_5, %c0_6], %6 {strides = array<i32>} : memref<8x128xf32, #tpu.memory_space<vmem>>, vector<8x128xf32>,
    return
  }
  func.func @transform_0(%arg0: i32, %arg1: i32) -> (i32, i32) {
    %c0_i32 = arith.constant 0 : i32
    %c0_i32_0 = arith.constant 0 : i32
    return %arg0, %c0_i32 : i32, i32
  }
  func.func @transform_1(%arg0: i32, %arg1: i32) -> (i32, i32) {
    %c0_i32 = arith.constant 0 : i32
    %c0_i32_0 = arith.constant 0 : i32
    return %c0_i32, %arg1 : i32, i32
  }
  func.func @transform_2(%arg0: i32, %arg1: i32) -> (i32, i32) {
    %c0_i32 = arith.constant 0 : i32
    %c0_i32_0 = arith.constant 0 : i32
    return %c0_i32, %arg1 : i32, i32
  }
  func.func @transform_3(%arg0: i32, %arg1: i32) -> (i32, i32) {
    %c0_i32 = arith.constant 0 : i32
    return %arg0, %arg1 : i32, i32
  }
}

</mosaic_0001>

<llo_original>
// kernel: tpu_custom_call.1
$region0: #{tpu_custom_call.1}
  #allocation0 [shape = 'u32[]', space=smem, size = 0x4, offset = 0x4, fixed_abs, tag = 'smem constant byte address 0x4 - core index']
  #allocation1 [shape = 'u32[72,128]{1,0:T(1,128)}', space=vmem, size = 0x9000, scoped, tag = 'internal scratch']
  %s0 = inlined_call_operand.hbm [shape: f32[8,32], index: 0, kind: input, shape index: {}]
  %s1 = inlined_call_operand.hbm [shape: f32[32,128], index: 1, kind: input, shape index: {}]
  %s2 = inlined_call_operand.vmem [shape: f32[1,128], index: 2, kind: input, shape index: {}]
  %s3 = inlined_call_operand.hbm [shape: f32[8,128], index: 3, kind: output, shape index: {}]
  %s4 = sld [smem:[#allocation0]]
  $region30: #{tpu_custom_call.1} parent=0
    _
  %s6 = ssub.s32 1, %s4
  %s7 = scalar_select 0, %s6, %s4
  $region1: #{tpu_custom_call.1} parent=0
    #allocation2 [shape = 'u8[4096]{0}', space=vmem, size = 0x1000, scoped, tag = 'input window, operand 0, single buffered']
    #allocation3 [shape = 's32[1]{0}', space=sflag, size = 0x4, scoped, tag = 'scoped memory for tpu_custom_call.1']
    #allocation4 [shape = 's32[1]{0}', space=sflag, size = 0x4, scoped, tag = 'scoped memory for tpu_custom_call.1']
    #allocation5 [shape = 'u8[16384]{0}', space=vmem, size = 0x4000, scoped, tag = 'input window, operand 1, single buffered']
    #allocation6 [shape = 's32[1]{0}', space=sflag, size = 0x4, scoped, tag = 'scoped memory for tpu_custom_call.1']
    #allocation7 [shape = 'u8[4096]{0}', space=vmem, size = 0x1000, scoped, tag = 'output window, operand 0, single buffered']
    %8 = vsyncpa [#allocation3], 0
    %9 = vsyncpa [#allocation6], 0
    %10 = vsyncpa [#allocation4], 0
    // Predicated region
    $region2: #{tpu_custom_call.1} parent=1 // pred_check
      _
    $region3: #{tpu_custom_call.1} parent=1 // pred_check_branch
      %12 = sbr.rel (0) target = $region5
    $region4: #{tpu_custom_call.1} parent=1 // pred_region
      %14 = vsyncadd [#allocation3], 0
      %s16 = sshll.u32 %s0, 4
      %s17 = int_to_ptr.hbm [resolvable:$true] %s16
      %s18 = sshll.u32 [#allocation2], 4
      %s19 = int_to_ptr.vmem [resolvable:$true] %s18
      %21 = dma.hbm_to_vmem [thread:$0]  %s17, 128, %s19, [#allocation3]
    $region5: #{tpu_custom_call.1} parent=1 // pred_fallthru
      _
    // Predicated region
    $region6: #{tpu_custom_call.1} parent=1 // pred_check
      _
    $region7: #{tpu_custom_call.1} parent=1 // pred_check_branch
      %23 = sbr.rel (0) target = $region9
    $region8: #{tpu_custom_call.1} parent=1 // pred_region
      %25 = vsyncadd [#allocation6], 0
      %s26 = sshll.u32 %s1, 4
      %s27 = int_to_ptr.hbm [resolvable:$true] %s26
      %s28 = sshll.u32 [#allocation5], 4
      %s29 = int_to_ptr.vmem [resolvable:$true] %s28
      %34 = dma.hbm_to_vmem [thread:$0]  %s27, 512, %s29, [#allocation6], 128, 128, 8
    $region9: #{tpu_custom_call.1} parent=1 // pred_fallthru
      _
    // Predicated region
    $region10: #{tpu_custom_call.1} parent=1 // pred_check
      _
    $region11: #{tpu_custom_call.1} parent=1 // pred_check_branch
      %36 = sbr.rel (0) target = $region13
    $region12: #{tpu_custom_call.1} parent=1 // pred_region
      _
    $region13: #{tpu_custom_call.1} parent=1 // pred_fallthru
      _
    // Predicated region
    $region14: #{tpu_custom_call.1} parent=1 // pred_check
      _
    $region15: #{tpu_custom_call.1} parent=1 // pred_check_branch
      %38 = sbr.rel (0) target = $region17
    $region16: #{tpu_custom_call.1} parent=1 // pred_region
      %40 = dma.done [#allocation3], 128
    $region17: #{tpu_custom_call.1} parent=1 // pred_fallthru
      _
    // Predicated region
    $region18: #{tpu_custom_call.1} parent=1 // pred_check
      _
    $region19: #{tpu_custom_call.1} parent=1 // pred_check_branch
      %42 = sbr.rel (0) target = $region21
    $region20: #{tpu_custom_call.1} parent=1 // pred_region
      %44 = dma.done [#allocation6], 512
    $region21: #{tpu_custom_call.1} parent=1 // pred_fallthru
      _
    %v45 = vld [vmem:[#allocation2] sm:$0xff]
    %v46 = vld [vmem:[#allocation5] sm:$0xff]
    %v47 = vld [vmem:[#allocation5 + $0x8] sm:$0xff]
    %v48 = vld [vmem:[#allocation5 + $0x10] sm:$0xff]
    %v49 = vld [vmem:[#allocation5 + $0x18] sm:$0xff]
    %v50 = vld [vmem:[%s2] sm:$0x1]
    %v52 = vperm.slane %v50, 0
    %vm54 = vcmask 261120
    %v56 = vsel %vm54, %v45, 0
    %58 = vmatpush.msra.mxu0 0.0
    %59 = vmatpush.msra.mxu0 0.0
    %60 = vmatpush.msra.mxu0 0.0
    %61 = vmatpush.msra.mxu0 0.0
    %62 = vmatpush.msra.mxu0 0.0
    %63 = vmatpush.msra.mxu0 0.0
    %64 = vmatpush.msra.mxu0 0.0
    %65 = vmatpush.msra.mxu0 0.0
    %66 = vmatpush.msra.mxu0 0.0
    %67 = vmatpush.msra.mxu0 0.0
    %68 = vmatpush.msra.mxu0 0.0
    %69 = vmatpush.msra.mxu0 0.0
    %70 = vmatpush.msra.mxu0 %v49
    %71 = vmatpush.msra.mxu0 %v48
    %72 = vmatpush.msra.mxu0 %v47
    %73 = vmatpush.msra.mxu0 %v46
    %74 = vmatmul.f32.gmra.mxu0 %v56
    %v75 = vpop.f32.mrf.mxu0
    %v76 = vadd.f32 %v52, %v75
    %77 = vdwg.mxu0
    %v78 = vtanh.pop %v76
    %79 = vst [vmem:[#allocation7] sm:$0xff] %v78
    // Predicated region
    $region22: #{tpu_custom_call.1} parent=1 // pred_check
      _
    $region23: #{tpu_custom_call.1} parent=1 // pred_check_branch
      %81 = sbr.rel (0) target = $region25
    $region24: #{tpu_custom_call.1} parent=1 // pred_region
      %83 = vsyncadd [#allocation4], 0
      %s85 = sshll.u32 [#allocation7], 4
      %s86 = int_to_ptr.vmem [resolvable:$true] %s85
      %s87 = sshll.u32 %s3, 4
      %s88 = int_to_ptr.hbm [resolvable:$true] %s87
      %90 = dma.vmem_to_hbm [thread:$0]  %s86, 128, %s88, [#allocation4]
    $region25: #{tpu_custom_call.1} parent=1 // pred_fallthru
      _
    // Predicated region
    $region26: #{tpu_custom_call.1} parent=1 // pred_check
      _
    $region27: #{tpu_custom_call.1} parent=1 // pred_check_branch
      %92 = sbr.rel (0) target = $region29
    $region28: #{tpu_custom_call.1} parent=1 // pred_region
      %94 = dma.done [#allocation4], 128
    $region29: #{tpu_custom_call.1} parent=1 // pred_fallthru
      _
    %95 = vsyncpa [#allocation3], 1
    %96 = vsyncpa [#allocation6], 1
    %97 = vsyncpa [#allocation4], 1

</llo_original>
